<compile_context>
chip_gen: v7x
topology: tpu7x:2x2x1
jax: 0.10.0
libtpu: 0.0.40
codegen_flags: <defaults>
</compile_context>

<pallas_src>
import functools
import math

import numpy as np
import jax
import jax.numpy as jnp
from jax.experimental import pallas as pl
from jax.experimental.pallas import tpu as pltpu


def _segmented_allreduce(x, seg, combine):
    """Reduce every contiguous `seg`-lane segment and broadcast back to all lanes.

    x: (1, L) with L % seg == 0.  Uses only lane rotations (XLU) + selects;
    no reshapes / relayouts are needed, so it stays fully lane-dense.
    """
    L = x.shape[-1]
    axis = x.ndim - 1
    lane = jax.lax.broadcasted_iota(jnp.int32, x.shape, axis)
    pow2 = (seg & (seg - 1)) == 0
    lane = (lane & (seg - 1)) if pow2 else jax.lax.rem(lane, seg)

    def partner(v, s):
        # value at segment-local index (n + s) % seg, for every lane j.
        fwd = pltpu.roll(v, shift=L - s, axis=axis)    # lane j <- v[j + s]
        bwd = pltpu.roll(v, shift=seg - s, axis=axis)  # lane j <- v[j + s - seg]
        return jnp.where(lane < seg - s, fwd, bwd)

    if pow2:                                 # log2(seg) rotate-allreduce steps
        s = 1
        while s < seg:
            x = combine(x, partner(x, s))
            s *= 2
        return x
    acc = x                                  # general fallback: seg - 1 steps
    for s in range(1, seg):
        acc = combine(acc, partner(x, s))
    return acc


def _image_attention_kernel(N, keyq_ref, cols_ref, mask_ref, wcat_ref, wl_ref,
                            bl_ref, out_ref):
    # keyq_ref : (C, B*N)  key + query projection + all per-channel biases
    # cols_ref : (2K, B*N) im2col rows for [spatial ; cum_spatial] att weight
    # mask_ref : (1, B*N)  key mask
    # wcat_ref : (C, 2K)   [weight_transform.W ; cum_weight_transform.W]
    # wl_ref   : (1, C)    logit_transform weight
    # bl_ref   : (1, 1)    logit_transform bias (SMEM scalar)
    # out_ref  : (3, B*N)  rows: 0=logit, 1=softmax weight, 2=new cum weight
    twoK = cols_ref.shape[0]
    K = twoK // 2
    pad = K // 2

    cols = cols_ref[...]                                        # (2K, BN) f32

    # Both Conv1d's as ONE 2D MXU matmul with a lane-dense RHS.
    conv = jnp.dot(wcat_ref[...], cols,
                   preferred_element_type=jnp.float32)          # (C, BN)
    fusion = keyq_ref[...].astype(jnp.float32) + conv
    t = jnp.tanh(fusion)

    # Conv1d(key_dim -> 1, kernel=1): one (1, C) @ (C, BN) matmul + SMEM bias.
    logit = jnp.dot(wl_ref[...], t,
                    preferred_element_type=jnp.float32) + bl_ref[0, 0]   # (1, BN)

    # Per-batch-element softmax over its N contiguous lanes (segments).
    masked = logit - (1.0 - mask_ref[...]) * 1e8
    m = _segmented_allreduce(masked, N, jnp.maximum)
    e = jnp.exp(masked - m)
    s = _segmented_allreduce(e, N, jnp.add)
    w = e / s                                      # exact divide (recurrence-safe)

    # Previous cum_spatial_att_weight == centre tap of the cum-conv im2col rows
    # (kept in f32, so the cum recurrence output is exact).
    cum_prev = cols[K + pad:K + pad + 1, :]                     # (1, BN)

    # Single merged, lane-dense output store.
    out_ref[...] = jnp.concatenate([logit, w, cum_prev + w], axis=0)


def image_attention(key, key_mask, query, spatial_att_weight,
                    cum_spatial_att_weight, params, *, block_b=512,
                    key_dtype=jnp.bfloat16):
    bs, C, N = key.shape
    K = params["w_conv_w"].shape[1]
    assert K % 2 == 1, "cover_kernel must be odd so Conv1d preserves length"
    pad = K // 2

    # ---- hoisted to XLA (fuses with the layout transpose below) -------------
    # Linear(query) + Linear bias + both Conv1d biases, folded into key.
    bias_all = (params["bq"] + params["b_conv_w"] + params["b_conv_cw"])[:, 0]   # (C,)
    q_proj = query @ params["wqT"].T + bias_all                                  # (bs, C)
    keyq = key + q_proj[:, :, None]                                              # (bs, C, N)

    # im2col rows for both convolutions, concatenated along the tap axis.
    def im2col(x):                                   # (bs, 1, N) -> (bs, K, N)
        xp = jnp.pad(x, ((0, 0), (0, 0), (pad, pad)))
        return jnp.concatenate([xp[:, :, k:k + N] for k in range(K)], axis=1)

    cols = jnp.concatenate([im2col(spatial_att_weight),
                            im2col(cum_spatial_att_weight)], axis=1)             # (bs, 2K, N)
    wcat = jnp.concatenate([params["w_conv_w"], params["w_conv_cw"]], axis=1)    # (C, 2K)

    # ---- batch blocking: B*N lanes per grid step, B*N % 128 == 0 ------------
    b_quant = 128 // math.gcd(128, N)            # smallest B with B*N % 128 == 0
    key_bytes = jnp.dtype(key_dtype).itemsize
    per_elem = N * (C * key_bytes + 2 * K * 4 + 4 + 3 * 4)       # bytes / batch elem
    max_b = max(b_quant, ((24 << 20) // (2 * per_elem)) // b_quant * b_quant)

    B = max(1, min(block_b, bs))
    B = -(-B // b_quant) * b_quant               # round up to the lane quantum
    if bs > b_quant:                             # >=2 blocks when the batch allows it
        half = -(-((bs + 1) // 2) // b_quant) * b_quant          # (v7x megacore)
        B = min(B, max(b_quant, half))
    B = min(B, max_b)
    num_blocks = -(-bs // B)
    bs_p = num_blocks * B
    BN = B * N

    def pad_b(x, value=0.0):
        return jnp.pad(x, ((0, bs_p - bs),) + ((0, 0),) * (x.ndim - 1),
                       constant_values=value)

    # Lane-dense 2D layouts: column index = b * N + n.
    keyq2d = pad_b(keyq).transpose(1, 0, 2).reshape(C, bs_p * N).astype(key_dtype)
    cols2d = pad_b(cols).transpose(1, 0, 2).reshape(2 * K, bs_p * N)
    # Mask padded with 1.0 so padded rows get an ordinary (discarded) softmax.
    mask2d = pad_b(key_mask.astype(jnp.float32), value=1.0).reshape(1, bs_p * N)

    step_bytes = 2 * (C * BN * key_bytes + 2 * K * BN * 4 + BN * 4 + 3 * BN * 4)
    vmem_limit = int(min(64 << 20, max(32 << 20, 2 * step_bytes)))

    kernel = functools.partial(_image_attention_kernel, N)

    out = pl.pallas_call(
        kernel,
        out_shape=jax.ShapeDtypeStruct((3, bs_p * N), jnp.float32),
        grid_spec=pltpu.PrefetchScalarGridSpec(
            num_scalar_prefetch=0,
            grid=(num_blocks,),
            in_specs=[
                pl.BlockSpec((C, BN), lambda i: (0, i)),            # keyq (bf16/f32)
                pl.BlockSpec((2 * K, BN), lambda i: (0, i)),        # im2col rows (f32)
                pl.BlockSpec((1, BN), lambda i: (0, i)),            # mask
                pl.BlockSpec((C, 2 * K), lambda i: (0, 0)),         # conv weights (shared)
                pl.BlockSpec((1, C), lambda i: (0, 0)),             # logit weight (shared)
                pl.BlockSpec(memory_space=pltpu.MemorySpace.SMEM),  # logit bias scalar
            ],
            out_specs=pl.BlockSpec((3, BN), lambda i: (0, i)),
        ),
        compiler_params=pltpu.CompilerParams(
            dimension_semantics=("parallel",),     # batch blocks are independent
            vmem_limit_bytes=vmem_limit),
    )(keyq2d, cols2d, mask2d, wcat, params["w_logit"], params["b_logit"])

    out3 = out.reshape(3, bs_p, N)[:, :bs, :]
    logit = out3[0][:, None, :]
    w = out3[1][:, None, :]
    cum = out3[2][:, None, :]
    return logit, w, cum


def _reference(key, key_mask, query, saw, csaw, params):
    """Pure-JAX reference reproducing the PyTorch forward."""
    q = query @ params["wqT"].T + params["bq"][:, 0]                # (bs, C)

    def conv(x, W, b):
        K = W.shape[1]
        pad = K // 2
        n = x.shape[2]
        xp = jnp.pad(x, ((0, 0), (0, 0), (pad, pad)))
        cols = jnp.stack([xp[:, 0, k:k + n] for k in range(K)], axis=1)  # (bs, K, n)
        return jnp.einsum('ck,bkn->bcn', W, cols) + b[None, :, :]

    wq = conv(saw, params["w_conv_w"], params["b_conv_w"])
    cwq = conv(csaw, params["w_conv_cw"], params["b_conv_cw"])
    fusion = key + q[:, :, None] + wq + cwq
    logit = jnp.einsum('oc,bcn->bon', params["w_logit"], jnp.tanh(fusion)) \
        + params["b_logit"][None]
    masked = logit - (1.0 - key_mask[:, None, :]) * 1e8
    bs, _, n = masked.shape
    w = jax.nn.softmax(masked.reshape(bs, n), axis=1).reshape(bs, 1, n)
    return logit, w, csaw + w


def _init_params(key_dim, query_dim, cover_kernel, seed=0):
    k = jax.random.split(jax.random.PRNGKey(seed), 8)
    s = 0.1
    return {
        "wqT": s * jax.random.normal(k[0], (key_dim, query_dim), jnp.float32),
        "bq": s * jax.random.normal(k[1], (key_dim, 1), jnp.float32),
        "w_conv_w": s * jax.random.normal(k[2], (key_dim, cover_kernel), jnp.float32),
        "b_conv_w": s * jax.random.normal(k[3], (key_dim, 1), jnp.float32),
        "w_conv_cw": s * jax.random.normal(k[4], (key_dim, cover_kernel), jnp.float32),
        "b_conv_cw": s * jax.random.normal(k[5], (key_dim, 1), jnp.float32),
        "w_logit": s * jax.random.normal(k[6], (1, key_dim), jnp.float32),
        "b_logit": s * jax.random.normal(k[7], (1, 1), jnp.float32),
    }


if __name__ == "__main__":
    bs, key_dim, query_dim, n, cover_kernel = 2, 32, 16, 16, 3

    params = _init_params(key_dim, query_dim, cover_kernel, seed=0)

    rk = jax.random.split(jax.random.PRNGKey(0), 5)
    key = jax.random.normal(rk[0], (bs, key_dim, n), jnp.float32)
    query = jax.random.normal(rk[1], (bs, query_dim), jnp.float32)
    saw = jax.random.uniform(rk[2], (bs, 1, n), jnp.float32)
    csaw = jax.random.uniform(rk[3], (bs, 1, n), jnp.float32)
    # binary mask with the last 4 positions masked out per batch element
    key_mask = jnp.concatenate(
        [jnp.ones((bs, n - 4), jnp.float32), jnp.zeros((bs, 4), jnp.float32)], axis=1)

    ref = _reference(key, key_mask, query, saw, csaw, params)

    # Exact path (f32 key): tight tolerance -- kernel math matches reference.
    run_f32 = jax.jit(functools.partial(image_attention, params=params,
                                        key_dtype=jnp.float32))
    out_f32 = jax.block_until_ready(run_f32(key, key_mask, query, saw, csaw))
    for got, want in zip(out_f32, ref):
        np.testing.assert_allclose(np.asarray(got), np.asarray(want),
                                   rtol=1e-4, atol=1e-5)

    # Perf path (bf16 key, the dominant HBM traffic): tolerance reflects only
    # the bf16 quantization of `key`; accumulation / softmax / cum stay f32.
    run_bf16 = jax.jit(functools.partial(image_attention, params=params,
                                         key_dtype=jnp.bfloat16))
    out_bf16 = jax.block_until_ready(run_bf16(key, key_mask, query, saw, csaw))
    for got, want in zip(out_bf16, ref):
        np.testing.assert_allclose(np.asarray(got), np.asarray(want),
                                   rtol=2e-2, atol=2e-2)

    print("KERNEL_OK")
</pallas_src>

<mosaic_0001>
module attributes {stable_mosaic.version = 11 : i64} {
  func.func @_image_attention_kernel(%arg0: i32, %arg1: memref<32x128xf32, #tpu.memory_space<vmem>>, %arg2: memref<6x128xf32, #tpu.memory_space<vmem>>, %arg3: memref<1x128xf32, #tpu.memory_space<vmem>>, %arg4: memref<32x6xf32, #tpu.memory_space<vmem>>, %arg5: memref<1x32xf32, #tpu.memory_space<vmem>>, %arg6: memref<1x1xf32, #tpu.memory_space<smem>>, %arg7: memref<3x128xf32, #tpu.memory_space<vmem>>) attributes {dimension_semantics = [#tpu.dimension_semantics<parallel>], iteration_bounds = array<i64: 1>, scalar_prefetch = 0 : i64, scratch_operands = 0 : i64, tpu.core_type = #tpu.core_type<tc>, window_params = [{transform_indices = @transform_0, window_bounds = array<i64: 32, 128>}, {transform_indices = @transform_1, window_bounds = array<i64: 6, 128>}, {transform_indices = @transform_2, window_bounds = array<i64: 1, 128>}, {pipeline_mode = #tpu.pipeline_mode<synchronous>, transform_indices = @transform_3, window_bounds = array<i64: 32, 6>}, {pipeline_mode = #tpu.pipeline_mode<synchronous>, transform_indices = @transform_4, window_bounds = array<i64: 1, 32>}, {transform_indices = @transform_5, window_bounds = array<i64: 1, 1>}, {transform_indices = @transform_6, window_bounds = array<i64: 3, 128>}]} {
    %c0 = arith.constant 0 : index
    %c0_0 = arith.constant 0 : index
    %0 = vector.load %arg2[%c0, %c0_0] : memref<6x128xf32, #tpu.memory_space<vmem>>, vector<6x128xf32>
    %c0_1 = arith.constant 0 : index
    %c0_2 = arith.constant 0 : index
    %1 = vector.load %arg4[%c0_1, %c0_2] : memref<32x6xf32, #tpu.memory_space<vmem>>, vector<32x6xf32>
    %cst = arith.constant dense<0.000000e+00> : vector<32x128xf32>
    %2 = tpu.matmul %1, %0, %cst {dimension_numbers = #tpu.dot_dimension_numbers<[1], [0], [0], [1], [0, 0, 1, 1], [], []>} : vector<32x6xf32>, vector<6x128xf32>, vector<32x128xf32> -> vector<32x128xf32>
    %c0_3 = arith.constant 0 : index
    %c0_4 = arith.constant 0 : index
    %3 = vector.load %arg1[%c0_3, %c0_4] : memref<32x128xf32, #tpu.memory_space<vmem>>, vector<32x128xf32>
    %4 = arith.addf %3, %2 : vector<32x128xf32>
    %5 = math.tanh %4 : vector<32x128xf32>
    %c0_5 = arith.constant 0 : index
    %c0_6 = arith.constant 0 : index
    %6 = vector.load %arg5[%c0_5, %c0_6] : memref<1x32xf32, #tpu.memory_space<vmem>>, vector<1x32xf32>
    %cst_7 = arith.constant dense<0.000000e+00> : vector<1x128xf32>
    %7 = tpu.matmul %6, %5, %cst_7 {dimension_numbers = #tpu.dot_dimension_numbers<[1], [0], [0], [1], [0, 0, 1, 1], [], []>} : vector<1x32xf32>, vector<32x128xf32>, vector<1x128xf32> -> vector<1x128xf32>
    %c0_8 = arith.constant 0 : index
    %c0_9 = arith.constant 0 : index
    %8 = memref.load %arg6[%c0_8, %c0_9] : memref<1x1xf32, #tpu.memory_space<smem>>
    %9 = vector.broadcast %8 : f32 to vector<1x128xf32>
    %10 = arith.addf %7, %9 : vector<1x128xf32>
    %c0_10 = arith.constant 0 : index
    %c0_11 = arith.constant 0 : index
    %11 = vector.load %arg3[%c0_10, %c0_11] : memref<1x128xf32, #tpu.memory_space<vmem>>, vector<1x128xf32>
    %cst_12 = arith.constant 1.000000e+00 : f32
    %12 = vector.broadcast %cst_12 : f32 to vector<1x128xf32>
    %13 = arith.subf %12, %11 : vector<1x128xf32>
    %cst_13 = arith.constant 1.000000e+08 : f32
    %14 = vector.broadcast %cst_13 : f32 to vector<1x128xf32>
    %15 = arith.mulf %13, %14 : vector<1x128xf32>
    %16 = arith.subf %10, %15 : vector<1x128xf32>
    %17 = tpu.iota {dimensions = array<i32: 1>} : vector<1x128xi32>
    %c15_i32 = arith.constant 15 : i32
    %18 = vector.broadcast %c15_i32 : i32 to vector<1x128xi32>
    %19 = arith.andi %17, %18 : vector<1x128xi32>
    %c127_i32 = arith.constant 127 : i32
    %20 = tpu.dynamic_rotate %16 by %c127_i32 dim 1 : vector<1x128xf32>, i32 -> vector<1x128xf32>
    %c15_i32_14 = arith.constant 15 : i32
    %21 = tpu.dynamic_rotate %16 by %c15_i32_14 dim 1 : vector<1x128xf32>, i32 -> vector<1x128xf32>
    %c15_i32_15 = arith.constant 15 : i32
    %22 = vector.broadcast %c15_i32_15 : i32 to vector<1x128xi32>
    %23 = arith.cmpi slt, %19, %22 : vector<1x128xi32>
    %24 = arith.select %23, %20, %21 : vector<1x128xi1>, vector<1x128xf32>
    %25 = arith.maximumf %16, %24 : vector<1x128xf32>
    %c126_i32 = arith.constant 126 : i32
    %26 = tpu.dynamic_rotate %25 by %c126_i32 dim 1 : vector<1x128xf32>, i32 -> vector<1x128xf32>
    %c14_i32 = arith.constant 14 : i32
    %27 = tpu.dynamic_rotate %25 by %c14_i32 dim 1 : vector<1x128xf32>, i32 -> vector<1x128xf32>
    %c14_i32_16 = arith.constant 14 : i32
    %28 = vector.broadcast %c14_i32_16 : i32 to vector<1x128xi32>
    %29 = arith.cmpi slt, %19, %28 : vector<1x128xi32>
    %30 = arith.select %29, %26, %27 : vector<1x128xi1>, vector<1x128xf32>
    %31 = arith.maximumf %25, %30 : vector<1x128xf32>
    %c124_i32 = arith.constant 124 : i32
    %32 = tpu.dynamic_rotate %31 by %c124_i32 dim 1 : vector<1x128xf32>, i32 -> vector<1x128xf32>
    %c12_i32 = arith.constant 12 : i32
    %33 = tpu.dynamic_rotate %31 by %c12_i32 dim 1 : vector<1x128xf32>, i32 -> vector<1x128xf32>
    %c12_i32_17 = arith.constant 12 : i32
    %34 = vector.broadcast %c12_i32_17 : i32 to vector<1x128xi32>
    %35 = arith.cmpi slt, %19, %34 : vector<1x128xi32>
    %36 = arith.select %35, %32, %33 : vector<1x128xi1>, vector<1x128xf32>
    %37 = arith.maximumf %31, %36 : vector<1x128xf32>
    %c120_i32 = arith.constant 120 : i32
    %38 = tpu.dynamic_rotate %37 by %c120_i32 dim 1 : vector<1x128xf32>, i32 -> vector<1x128xf32>
    %c8_i32 = arith.constant 8 : i32
    %39 = tpu.dynamic_rotate %37 by %c8_i32 dim 1 : vector<1x128xf32>, i32 -> vector<1x128xf32>
    %c8_i32_18 = arith.constant 8 : i32
    %40 = vector.broadcast %c8_i32_18 : i32 to vector<1x128xi32>
    %41 = arith.cmpi slt, %19, %40 : vector<1x128xi32>
    %42 = arith.select %41, %38, %39 : vector<1x128xi1>, vector<1x128xf32>
    %43 = arith.maximumf %37, %42 : vector<1x128xf32>
    %44 = arith.subf %16, %43 : vector<1x128xf32>
    %45 = math.exp %44 : vector<1x128xf32>
    %46 = tpu.iota {dimensions = array<i32: 1>} : vector<1x128xi32>
    %c15_i32_19 = arith.constant 15 : i32
    %47 = vector.broadcast %c15_i32_19 : i32 to vector<1x128xi32>
    %48 = arith.andi %46, %47 : vector<1x128xi32>
    %c127_i32_20 = arith.constant 127 : i32
    %49 = tpu.dynamic_rotate %45 by %c127_i32_20 dim 1 : vector<1x128xf32>, i32 -> vector<1x128xf32>
    %c15_i32_21 = arith.constant 15 : i32
    %50 = tpu.dynamic_rotate %45 by %c15_i32_21 dim 1 : vector<1x128xf32>, i32 -> vector<1x128xf32>
    %c15_i32_22 = arith.constant 15 : i32
    %51 = vector.broadcast %c15_i32_22 : i32 to vector<1x128xi32>
    %52 = arith.cmpi slt, %48, %51 : vector<1x128xi32>
    %53 = arith.select %52, %49, %50 : vector<1x128xi1>, vector<1x128xf32>
    %54 = arith.addf %45, %53 : vector<1x128xf32>
    %c126_i32_23 = arith.constant 126 : i32
    %55 = tpu.dynamic_rotate %54 by %c126_i32_23 dim 1 : vector<1x128xf32>, i32 -> vector<1x128xf32>
    %c14_i32_24 = arith.constant 14 : i32
    %56 = tpu.dynamic_rotate %54 by %c14_i32_24 dim 1 : vector<1x128xf32>, i32 -> vector<1x128xf32>
    %c14_i32_25 = arith.constant 14 : i32
    %57 = vector.broadcast %c14_i32_25 : i32 to vector<1x128xi32>
    %58 = arith.cmpi slt, %48, %57 : vector<1x128xi32>
    %59 = arith.select %58, %55, %56 : vector<1x128xi1>, vector<1x128xf32>
    %60 = arith.addf %54, %59 : vector<1x128xf32>
    %c124_i32_26 = arith.constant 124 : i32
    %61 = tpu.dynamic_rotate %60 by %c124_i32_26 dim 1 : vector<1x128xf32>, i32 -> vector<1x128xf32>
    %c12_i32_27 = arith.constant 12 : i32
    %62 = tpu.dynamic_rotate %60 by %c12_i32_27 dim 1 : vector<1x128xf32>, i32 -> vector<1x128xf32>
    %c12_i32_28 = arith.constant 12 : i32
    %63 = vector.broadcast %c12_i32_28 : i32 to vector<1x128xi32>
    %64 = arith.cmpi slt, %48, %63 : vector<1x128xi32>
    %65 = arith.select %64, %61, %62 : vector<1x128xi1>, vector<1x128xf32>
    %66 = arith.addf %60, %65 : vector<1x128xf32>
    %c120_i32_29 = arith.constant 120 : i32
    %67 = tpu.dynamic_rotate %66 by %c120_i32_29 dim 1 : vector<1x128xf32>, i32 -> vector<1x128xf32>
    %c8_i32_30 = arith.constant 8 : i32
    %68 = tpu.dynamic_rotate %66 by %c8_i32_30 dim 1 : vector<1x128xf32>, i32 -> vector<1x128xf32>
    %c8_i32_31 = arith.constant 8 : i32
    %69 = vector.broadcast %c8_i32_31 : i32 to vector<1x128xi32>
    %70 = arith.cmpi slt, %48, %69 : vector<1x128xi32>
    %71 = arith.select %70, %67, %68 : vector<1x128xi1>, vector<1x128xf32>
    %72 = arith.addf %66, %71 : vector<1x128xf32>
    %73 = arith.divf %45, %72 : vector<1x128xf32>
    %74 = vector.extract_strided_slice %0 {offsets = [4, 0], sizes = [1, 128], strides = [1, 1]} : vector<6x128xf32> to vector<1x128xf32>
    %75 = arith.addf %74, %73 : vector<1x128xf32>
    %76 = tpu.concatenate %10, %73, %75 in 0 : vector<1x128xf32>, vector<1x128xf32>, vector<1x128xf32> -> vector<3x128xf32>
    %c0_32 = arith.constant 0 : index
    %c0_33 = arith.constant 0 : index
    %77 = vector.load %arg7[%c0_32, %c0_33] : memref<3x128xf32, #tpu.memory_space<vmem>>, vector<3x128xf32>
    tpu.vector_store %arg7[%c0_32, %c0_33], %76 {strides = array<i32>} : memref<3x128xf32, #tpu.memory_space<vmem>>, vector<3x128xf32>,
    return
  }
  func.func @transform_0(%arg0: i32) -> (i32, i32) {
    %c0_i32 = arith.constant 0 : i32
    %c0_i32_0 = arith.constant 0 : i32
    return %c0_i32, %arg0 : i32, i32
  }
  func.func @transform_1(%arg0: i32) -> (i32, i32) {
    %c0_i32 = arith.constant 0 : i32
    %c0_i32_0 = arith.constant 0 : i32
    return %c0_i32, %arg0 : i32, i32
  }
  func.func @transform_2(%arg0: i32) -> (i32, i32) {
    %c0_i32 = arith.constant 0 : i32
    %c0_i32_0 = arith.constant 0 : i32
    return %c0_i32, %arg0 : i32, i32
  }
  func.func @transform_3(%arg0: i32) -> (i32, i32) {
    %c0_i32 = arith.constant 0 : i32
    %c0_i32_0 = arith.constant 0 : i32
    %c0_i32_1 = arith.constant 0 : i32
    return %c0_i32, %c0_i32_0 : i32, i32
  }
  func.func @transform_4(%arg0: i32) -> (i32, i32) {
    %c0_i32 = arith.constant 0 : i32
    %c0_i32_0 = arith.constant 0 : i32
    %c0_i32_1 = arith.constant 0 : i32
    return %c0_i32, %c0_i32_0 : i32, i32
  }
  func.func @transform_5(%arg0: i32) -> (i32, i32) {
    %c0_i32 = arith.constant 0 : i32
    %c0_i32_0 = arith.constant 0 : i32
    %c0_i32_1 = arith.constant 0 : i32
    return %c0_i32, %c0_i32_0 : i32, i32
  }
  func.func @transform_6(%arg0: i32) -> (i32, i32) {
    %c0_i32 = arith.constant 0 : i32
    %c0_i32_0 = arith.constant 0 : i32
    return %c0_i32, %arg0 : i32, i32
  }
}

</mosaic_0001>

<llo_original>
// kernel: image_attention.1
$region0: #{image_attention.1}
  #allocation0 [shape = 'u32[]', space=smem, size = 0x4, offset = 0x4, fixed_abs, tag = 'smem constant byte address 0x4 - core index']
  #allocation1 [shape = 'u32[144,128]{1,0:T(1,128)}', space=vmem, size = 0x12000, scoped, tag = 'internal scratch']
  #allocation2 [shape = 'f32[1,1]{1,0:T(1,128)S(6)}', space=smem, size = 0x200, scoped, tag = 'scoped memory for image_attention.1']
  %s0 = inlined_call_operand.vmem [shape: f32[32,128], index: 0, kind: input, shape index: {}]
  %s1 = inlined_call_operand.vmem [shape: f32[6,128], index: 1, kind: input, shape index: {}]
  %s2 = inlined_call_operand.vmem [shape: f32[1,128], index: 2, kind: input, shape index: {}]
  %s3 = inlined_call_operand.vmem [shape: f32[32,6], index: 3, kind: input, shape index: {}]
  %s4 = inlined_call_operand.vmem [shape: f32[1,32], index: 4, kind: input, shape index: {}]
  %s5 = inlined_call_operand.<no memory space> [shape: f32[1,1], index: 5, kind: input, shape index: {}]
  %s6 = inlined_call_operand.vmem [shape: f32[3,128], index: 6, kind: output, shape index: {}]
  %s7 = sld [smem:[#allocation0]]
  $region34: #{image_attention.1} parent=0
    _
  %s9 = ssub.s32 1, %s7
  %s10 = scalar_select 0, %s9, %s7
  %11 = sst [smem:[#allocation2]] %s5
  // Predicated region
  $region2: #{image_attention.1} parent=0 // pred_check
    _
  $region3: #{image_attention.1} parent=0 // pred_check_branch
    %13 = sbr.rel (0) target = $region5
  $region4: #{image_attention.1} parent=0 // pred_region
    _
  $region5: #{image_attention.1} parent=0 // pred_fallthru
    _
  // Predicated region
  $region6: #{image_attention.1} parent=0 // pred_check
    _
  $region7: #{image_attention.1} parent=0 // pred_check_branch
    %15 = sbr.rel (0) target = $region9
  $region8: #{image_attention.1} parent=0 // pred_region
    _
  $region9: #{image_attention.1} parent=0 // pred_fallthru
    _
  // Predicated region
  $region10: #{image_attention.1} parent=0 // pred_check
    _
  $region11: #{image_attention.1} parent=0 // pred_check_branch
    %17 = sbr.rel (0) target = $region13
  $region12: #{image_attention.1} parent=0 // pred_region
    _
  $region13: #{image_attention.1} parent=0 // pred_fallthru
    _
  // Predicated region
  $region14: #{image_attention.1} parent=0 // pred_check
    _
  $region15: #{image_attention.1} parent=0 // pred_check_branch
    %19 = sbr.rel (0) target = $region17
  $region16: #{image_attention.1} parent=0 // pred_region
    _
  $region17: #{image_attention.1} parent=0 // pred_fallthru
    _
  // Predicated region
  $region18: #{image_attention.1} parent=0 // pred_check
    _
  $region19: #{image_attention.1} parent=0 // pred_check_branch
    %21 = sbr.rel (0) target = $region21
  $region20: #{image_attention.1} parent=0 // pred_region
    _
  $region21: #{image_attention.1} parent=0 // pred_fallthru
    _
  // Predicated region
  $region22: #{image_attention.1} parent=0 // pred_check
    _
  $region23: #{image_attention.1} parent=0 // pred_check_branch
    %23 = sbr.rel (0) target = $region25
  $region24: #{image_attention.1} parent=0 // pred_region
    _
  $region25: #{image_attention.1} parent=0 // pred_fallthru
    _
  %v24 = vld [vmem:[%s1] sm:$0x3f]
  %v25 = vld [vmem:[%s3] sm:$0xff]
  %v26 = vld [vmem:[%s3 + $0x8] sm:$0xff]
  %v27 = vld [vmem:[%s3 + $0x10] sm:$0xff]
  %v28 = vld [vmem:[%s3 + $0x18] sm:$0xff]
  %vm29 = vcmask 48128
  %v31 = vsel %vm29, %v25, 0
  %v34 = vsel %vm29, %v26, 0
  %v37 = vsel %vm29, %v27, 0
  %v40 = vsel %vm29, %v28, 0
  %vm42 = vcmask 1045504
  %v44 = vsel %vm42, %v24, 0
  %46 = vmatprep.subr.mxu0 0.0
  %47 = vmatpush1.msra.mxu0 %v44
  %48 = vmatprep.subr.mxu0 0.0
  %49 = vmatpush1.msra.mxu0 0.0
  %50 = vmatprep.subr.mxu0 0.0
  %51 = vmatpush1.msra.mxu0 0.0
  %52 = vmatprep.subr.mxu0 0.0
  %53 = vmatpush1.msra.mxu0 0.0
  %54 = vmatprep.subr.mxu0 0.0
  %55 = vmatpush1.msra.mxu0 0.0
  %56 = vmatprep.subr.mxu0 0.0
  %57 = vmatpush1.msra.mxu0 0.0
  %58 = vmatprep.subr.mxu0 0.0
  %59 = vmatpush1.msra.mxu0 0.0
  %60 = vmatprep.subr.mxu0 0.0
  %61 = vmatpush1.msra.mxu0 0.0
  %62 = vmatprep.subr.mxu0 0.0
  %63 = vmatpush1.msra.mxu0 0.0
  %64 = vmatprep.subr.mxu0 0.0
  %65 = vmatpush1.msra.mxu0 0.0
  %66 = vmatprep.subr.mxu0 0.0
  %67 = vmatpush1.msra.mxu0 0.0
  %68 = vmatprep.subr.mxu0 0.0
  %69 = vmatpush1.msra.mxu0 0.0
  %70 = vmatprep.subr.mxu0 0.0
  %71 = vmatpush1.msra.mxu0 0.0
  %72 = vmatprep.subr.mxu0 0.0
  %73 = vmatpush1.msra.mxu0 0.0
  %74 = vmatprep.subr.mxu0 0.0
  %75 = vmatpush1.msra.mxu0 0.0
  %76 = vmatprep.subr.mxu0 0.0
  %77 = vmatpush1.msra.mxu0 0.0
  %78 = vmatprep.subr.mxu0 0.0
  %79 = vmatpush1.msra.mxu0 0.0
  %80 = vmatprep.subr.mxu0 0.0
  %81 = vmatpush1.msra.mxu0 0.0
  %82 = vmatprep.subr.mxu0 0.0
  %83 = vmatpush1.msra.mxu0 0.0
  %84 = vmatprep.subr.mxu0 0.0
  %85 = vmatpush1.msra.mxu0 0.0
  %86 = vmatprep.subr.mxu0 0.0
  %87 = vmatpush1.msra.mxu0 0.0
  %88 = vmatprep.subr.mxu0 0.0
  %89 = vmatpush1.msra.mxu0 0.0
  %90 = vmatprep.subr.mxu0 0.0
  %91 = vmatpush1.msra.mxu0 0.0
  %92 = vmatprep.subr.mxu0 0.0
  %93 = vmatpush1.msra.mxu0 0.0
  %94 = vmatprep.subr.mxu0 0.0
  %95 = vmatpush1.msra.mxu0 0.0
  %96 = vmatprep.subr.mxu0 0.0
  %97 = vmatpush1.msra.mxu0 0.0
  %98 = vmatprep.subr.mxu0 0.0
  %99 = vmatpush1.msra.mxu0 0.0
  %100 = vmatprep.subr.mxu0 0.0
  %101 = vmatpush1.msra.mxu0 0.0
  %102 = vmatprep.subr.mxu0 0.0
  %103 = vmatpush1.msra.mxu0 0.0
  %104 = vmatprep.subr.mxu0 0.0
  %105 = vmatpush1.msra.mxu0 0.0
  %106 = vmatprep.subr.mxu0 0.0
  %107 = vmatpush1.msra.mxu0 0.0
  %108 = vmatprep.subr.mxu0 0.0
  %109 = vmatpush1.msra.mxu0 0.0
  %110 = vmatprep.mubr.f32.mxu0 0.0
  %111 = vmatmul.mubr.f32.gmra.mrb[0].mxu0 %v31
  %v112 = vpop.f32.mrb[0].mxu0
  %v113 = vadd.f32 0.0, %v112
  %v114 = vpop.f32.mrb[0].mxu0
  %115 = vmatprep.mubr.f32.mxu0 0.0
  %116 = vmatmul.mubr.f32.gmra.mrb[0].mxu0 %v34
  %v117 = vpop.f32.mrb[0].mxu0
  %v118 = vadd.f32 0.0, %v117
  %v119 = vpop.f32.mrb[0].mxu0
  %120 = vmatprep.mubr.f32.mxu0 0.0
  %121 = vmatmul.mubr.f32.gmra.mrb[0].mxu0 %v37
  %v122 = vpop.f32.mrb[0].mxu0
  %v123 = vadd.f32 0.0, %v122
  %v124 = vpop.f32.mrb[0].mxu0
  %125 = vmatprep.mubr.f32.mxu0 0.0
  %126 = vmatmul.mubr.f32.gmra.mrb[0].mxu0 %v40
  %v127 = vpop.f32.mrb[0].mxu0
  %v128 = vadd.f32 0.0, %v127
  %v129 = vpop.f32.mrb[0].mxu0
  %130 = vdwg.mxu0
  %v131 = vld [vmem:[%s0] sm:$0xff]
  %v132 = vld [vmem:[%s0 + $0x8] sm:$0xff]
  %v133 = vld [vmem:[%s0 + $0x10] sm:$0xff]
  %v134 = vld [vmem:[%s0 + $0x18] sm:$0xff]
  %v135 = vadd.f32 %v131, %v113
  %v136 = vadd.f32 %v132, %v118
  %v137 = vadd.f32 %v133, %v123
  %v138 = vadd.f32 %v134, %v128
  %v139 = vtanh.pop %v135
  %v140 = vtanh.pop %v136
  %v141 = vtanh.pop %v137
  %v142 = vtanh.pop %v138
  %v143 = vld [vmem:[%s4] sm:$0x1]
  %s144 = sld [smem:[#allocation2]]
  %v145 = vstv %s144
  %vm146 = vcmask 261120
  %v148 = vsel %vm146, %v143, 0
  %150 = vmatprep.subr.mxu0 0.0
  %151 = vmatpush1.msra.mxu0 %v139
  %152 = vmatprep.subr.mxu0 0.0
  %153 = vmatpush1.msra.mxu0 %v140
  %154 = vmatprep.subr.mxu0 0.0
  %155 = vmatpush1.msra.mxu0 %v141
  %156 = vmatprep.subr.mxu0 0.0
  %157 = vmatpush1.msra.mxu0 %v142
  %158 = vmatprep.subr.mxu0 0.0
  %159 = vmatpush1.msra.mxu0 0.0
  %160 = vmatprep.subr.mxu0 0.0
  %161 = vmatpush1.msra.mxu0 0.0
  %162 = vmatprep.subr.mxu0 0.0
  %163 = vmatpush1.msra.mxu0 0.0
  %164 = vmatprep.subr.mxu0 0.0
  %165 = vmatpush1.msra.mxu0 0.0
  %166 = vmatprep.subr.mxu0 0.0
  %167 = vmatpush1.msra.mxu0 0.0
  %168 = vmatprep.subr.mxu0 0.0
  %169 = vmatpush1.msra.mxu0 0.0
  %170 = vmatprep.subr.mxu0 0.0
  %171 = vmatpush1.msra.mxu0 0.0
  %172 = vmatprep.subr.mxu0 0.0
  %173 = vmatpush1.msra.mxu0 0.0
  %174 = vmatprep.subr.mxu0 0.0
  %175 = vmatpush1.msra.mxu0 0.0
  %176 = vmatprep.subr.mxu0 0.0
  %177 = vmatpush1.msra.mxu0 0.0
  %178 = vmatprep.subr.mxu0 0.0
  %179 = vmatpush1.msra.mxu0 0.0
  %180 = vmatprep.subr.mxu0 0.0
  %181 = vmatpush1.msra.mxu0 0.0
  %182 = vmatprep.subr.mxu0 0.0
  %183 = vmatpush1.msra.mxu0 0.0
  %184 = vmatprep.subr.mxu0 0.0
  %185 = vmatpush1.msra.mxu0 0.0
  %186 = vmatprep.subr.mxu0 0.0
  %187 = vmatpush1.msra.mxu0 0.0
  %188 = vmatprep.subr.mxu0 0.0
  %189 = vmatpush1.msra.mxu0 0.0
  %190 = vmatprep.subr.mxu0 0.0
  %191 = vmatpush1.msra.mxu0 0.0
  %192 = vmatprep.subr.mxu0 0.0
  %193 = vmatpush1.msra.mxu0 0.0
  %194 = vmatprep.subr.mxu0 0.0
  %195 = vmatpush1.msra.mxu0 0.0
  %196 = vmatprep.subr.mxu0 0.0
  %197 = vmatpush1.msra.mxu0 0.0
  %198 = vmatprep.subr.mxu0 0.0
  %199 = vmatpush1.msra.mxu0 0.0
  %200 = vmatprep.subr.mxu0 0.0
  %201 = vmatpush1.msra.mxu0 0.0
  %202 = vmatprep.subr.mxu0 0.0
  %203 = vmatpush1.msra.mxu0 0.0
  %204 = vmatprep.subr.mxu0 0.0
  %205 = vmatpush1.msra.mxu0 0.0
  %206 = vmatprep.subr.mxu0 0.0
  %207 = vmatpush1.msra.mxu0 0.0
  %208 = vmatprep.subr.mxu0 0.0
  %209 = vmatpush1.msra.mxu0 0.0
  %210 = vmatprep.subr.mxu0 0.0
  %211 = vmatpush1.msra.mxu0 0.0
  %212 = vmatprep.subr.mxu0 0.0
  %213 = vmatpush1.msra.mxu0 0.0
  %214 = vmatprep.mubr.f32.mxu0 0.0
  %215 = vmatmul.mubr.f32.gmra.mrb[0].mxu0 %v148
  %v216 = vpop.f32.mrb[0].mxu0
  %v217 = vadd.f32 %v145, %v216
  %v218 = vpop.f32.mrb[0].mxu0
  %219 = vdwg.mxu0
  %v220 = vld [vmem:[%s2] sm:$0x1]
  %v221 = vsub.f32 1.0, %v220
  %v222 = vmul.f32 %v221, 1e+08
  %v223 = vsub.f32 %v217, %v222
  %v224 = vlaneseq
  %v225 = vand.u32 %v224, 127
  %v226 = vand.u32 %v225, 15
  %227 = vrot.lane.b32.xlu0 %v223, 127
  %v228 = vpop.permute.xlu0 %227
  %229 = vrot.lane.b32.xlu0 %v223, 15
  %v230 = vpop.permute.xlu0 %229
  %vm231 = vcmp.lt.s32.totalorder %v226, 15
  %v232 = vsel %vm231, %v228, %v230
  %v233 = vmax.f32 %v223, %v232
  %234 = vrot.lane.b32.xlu0 %v233, 126
  %v235 = vpop.permute.xlu0 %234
  %236 = vrot.lane.b32.xlu0 %v233, 14
  %v237 = vpop.permute.xlu0 %236
  %vm238 = vcmp.lt.s32.totalorder %v226, 14
  %v239 = vsel %vm238, %v235, %v237
  %v240 = vmax.f32 %v233, %v239
  %241 = vrot.lane.b32.xlu0 %v240, 124
  %v242 = vpop.permute.xlu0 %241
  %243 = vrot.lane.b32.xlu0 %v240, 12
  %v244 = vpop.permute.xlu0 %243
  %vm245 = vcmp.lt.s32.totalorder %v226, 12
  %v246 = vsel %vm245, %v242, %v244
  %v247 = vmax.f32 %v240, %v246
  %248 = vrot.lane.b32.xlu0 %v247, 120
  %v249 = vpop.permute.xlu0 %248
  %250 = vrot.lane.b32.xlu0 %v247, 8
  %v251 = vpop.permute.xlu0 %250
  %vm252 = vcmp.lt.s32.totalorder %v226, 8
  %v253 = vsel %vm252, %v249, %v251
  %v254 = vmax.f32 %v247, %v253
  %v255 = vsub.f32 %v223, %v254
  %v256 = vmul.f32 %v255, 1.442695
  %v257 = vpow.pop %v256
  %258 = vrot.lane.b32.xlu0 %v257, 127
  %v259 = vpop.permute.xlu0 %258
  %260 = vrot.lane.b32.xlu0 %v257, 15
  %v261 = vpop.permute.xlu0 %260
  %v262 = vsel %vm231, %v259, %v261
  %v263 = vadd.f32 %v257, %v262
  %264 = vrot.lane.b32.xlu0 %v263, 126
  %v265 = vpop.permute.xlu0 %264
  %266 = vrot.lane.b32.xlu0 %v263, 14
  %v267 = vpop.permute.xlu0 %266
  %v268 = vsel %vm238, %v265, %v267
  %v269 = vadd.f32 %v263, %v268
  %270 = vrot.lane.b32.xlu0 %v269, 124
  %v271 = vpop.permute.xlu0 %270
  %272 = vrot.lane.b32.xlu0 %v269, 12
  %v273 = vpop.permute.xlu0 %272
  %v274 = vsel %vm245, %v271, %v273
  %v275 = vadd.f32 %v269, %v274
  %276 = vrot.lane.b32.xlu0 %v275, 120
  %v277 = vpop.permute.xlu0 %276
  %278 = vrot.lane.b32.xlu0 %v275, 8
  %v279 = vpop.permute.xlu0 %278
  %v280 = vsel %vm252, %v277, %v279
  %v281 = vadd.f32 %v275, %v280
  %v282 = vrcp.pop %v281
  %v283 = vmul.f32 %v257, %v282
  %v285 = vrot.slane %v283, 4
  %v287 = vadd.f32 %v24, %v285
  %v288 = vrot.slane %v283, 7
  %v291 = vrot.slane %v287, 2
  %vm293 = vcmask 1040384
  %v294 = vsel %vm293, %v217, %v288
  %vm295 = vcmask 1041408
  %v296 = vsel %vm295, %v294, %v291
  %297 = vst [vmem:[%s6] sm:$0x7] %v296
  // Predicated region
  $region26: #{image_attention.1} parent=0 // pred_check
    _
  $region27: #{image_attention.1} parent=0 // pred_check_branch
    %299 = sbr.rel (0) target = $region29
  $region28: #{image_attention.1} parent=0 // pred_region
    _
  $region29: #{image_attention.1} parent=0 // pred_fallthru
    _
  // Predicated region
  $region30: #{image_attention.1} parent=0 // pred_check
    _
  $region31: #{image_attention.1} parent=0 // pred_check_branch
    %301 = sbr.rel (0) target = $region33
  $region32: #{image_attention.1} parent=0 // pred_region
    _
  $region33: #{image_attention.1} parent=0 // pred_fallthru
    _

</llo_original>
